<compile_context>
chip_gen: v7x
topology: tpu7x:2x2x1
jax: 0.10.0
libtpu: 0.0.40
codegen_flags: <defaults>
</compile_context>

<pallas_src>
import functools

import jax
import jax.numpy as jnp
from jax.experimental import pallas as pl
from jax.experimental.pallas import tpu as pltpu


# ---------------- Pallas kernel ---------------------------------------------

def _actnorm_kernel(x_ref, p_ref, o_ref, *, reverse):
    p = p_ref[...]                         # (r_blk, 2): [:,0]=bias, [:,1]=scale
    bias = p[:, 0:1]
    scale = p[:, 1:2]
    x = x_ref[...].astype(p.dtype)         # compute dtype chosen by the wrapper
    if reverse:
        y = x * scale - bias               # scale holds exp(-logs)
    else:
        y = (x + bias) * scale             # scale holds exp(+logs)
    o_ref[...] = y.astype(o_ref.dtype)


# ---------------- tuning helpers ---------------------------------------------

def _round_up(x, m):
    return -(-x // m) * m


def _sublane(dtype):
    # minimum second-minor tile extent per dtype packing
    return {4: 8, 2: 16, 1: 32}.get(jnp.dtype(dtype).itemsize, 8)


def _tpu_tuning():
    """Generation-aware (tile_budget, vmem_limit, min_grid_steps, bf16_compute_ok)."""
    kind = ""
    try:
        kind = jax.devices()[0].device_kind.lower()
    except Exception:
        pass
    vmem_phys = None
    try:
        vmem_phys = int(pltpu.get_tpu_info().vmem_capacity_bytes)
    except Exception:
        pass
    if vmem_phys is not None:
        big_vmem = vmem_phys >= (96 << 20)
    else:
        # Fall back to device_kind; unknown -> conservative (v7x-safe) budget.
        big_vmem = any(t in kind for t in ("v4", "v5", "v6"))
    if big_vmem:        # v5e / v6e class: 128 MiB physical VMEM
        target_bytes, vmem_limit, min_steps = 20 << 20, 96 << 20, 4
    else:               # v7x class: 64 MiB per TensorCore, 2 TCs
        target_bytes, vmem_limit, min_steps = 10 << 20, 48 << 20, 8
    bf16_compute = any(t in kind for t in ("v6", "v7"))   # bf16 VPU present
    return target_bytes, vmem_limit, min_steps, bf16_compute


def _choose_tiles(n_rows, L, itemsize, sublane, target_bytes, min_steps):
    """Pick (r_blk, l_blk) block sizes for the (n_rows, L) slab.

    Invariants: l_blk == L or l_blk % 128 == 0;  r_blk == n_rows or
    r_blk % sublane == 0;  r_blk * l_blk * itemsize <= ~target_bytes;  the
    grid has >= min_steps steps whenever the tensor is big enough to split.
    """
    # Lane (last-dim) block: whole row when a minimal (sublane, L) tile fits,
    # otherwise the largest multiple of 128 within budget (lane-dense stores;
    # only the final partial lane block, if any, is masked).
    if L * itemsize * sublane <= target_bytes:
        l_blk = L
    else:
        l_blk = max(128, ((target_bytes // (sublane * itemsize)) // 128) * 128)

    # Row block: as many sublane-aligned rows as fit the budget.
    budget_rows = max(1, target_bytes // (l_blk * itemsize))
    r_blk = max(sublane, (budget_rows // sublane) * sublane)
    r_blk = min(r_blk, _round_up(n_rows, sublane))

    # Guarantee enough grid steps for pipelining / multi-core sharding.
    lane_steps = pl.cdiv(L, l_blk)
    while lane_steps * pl.cdiv(n_rows, r_blk) < min_steps and r_blk > sublane:
        r_blk = max(sublane, ((r_blk // 2) // sublane) * sublane)

    # Full-extent blocks are always legal (even for odd extents) and avoid
    # allocating padded VMEM buffers larger than the array.
    if r_blk >= n_rows:
        r_blk = n_rows
    if l_blk >= L:
        l_blk = L
    return r_blk, l_blk


# ---------------- wrapper ----------------------------------------------------

def actnorm2d(x, bias, logs, *, reverse=False):
    """Apply the ActNorm affine with a single fused Pallas pass.

    x:    (B, C, H, W)
    bias: (1, C, 1, 1)
    logs: (1, C, 1, 1)
    """
    B, C, H, W = x.shape
    L = H * W
    n_rows = B * C

    # Lane-dense 2-D view of the tensor (layout plumbing, free).
    x2 = x.reshape(n_rows, L)

    target_bytes, vmem_limit, min_steps, bf16_compute = _tpu_tuning()
    compute_dtype = (jnp.bfloat16
                     if (x.dtype == jnp.bfloat16 and bf16_compute)
                     else jnp.float32)

    # Pack per-row (= per (batch, channel)) bias & scale into one (n_rows, 2)
    # array -> a single tiny DMA per row block.
    b_c = bias.reshape(C).astype(jnp.float32)
    s_c = jnp.exp((-1.0 if reverse else 1.0) * logs.reshape(C).astype(jnp.float32))
    params = jnp.stack(
        [jnp.tile(b_c, (B,)), jnp.tile(s_c, (B,))], axis=-1
    ).astype(compute_dtype)                                    # (n_rows, 2)

    itemsize = jnp.dtype(x.dtype).itemsize
    sub = max(_sublane(x.dtype), _sublane(compute_dtype))
    r_blk, l_blk = _choose_tiles(n_rows, L, itemsize, sub, target_bytes, min_steps)
    grid = (pl.cdiv(n_rows, r_blk), pl.cdiv(L, l_blk))

    out2 = pl.pallas_call(
        functools.partial(_actnorm_kernel, reverse=reverse),
        out_shape=jax.ShapeDtypeStruct((n_rows, L), x.dtype),
        grid=grid,
        in_specs=[
            pl.BlockSpec((r_blk, l_blk), lambda i, j: (i, j)),   # x slab
            pl.BlockSpec((r_blk, 2), lambda i, j: (i, 0)),       # packed bias/scale
        ],
        out_specs=pl.BlockSpec((r_blk, l_blk), lambda i, j: (i, j)),
        compiler_params=pltpu.CompilerParams(
            dimension_semantics=("parallel", "parallel"),
            vmem_limit_bytes=vmem_limit,
        ),
    )(x2, params)

    return out2.reshape(B, C, H, W)


# ---------------- module-level wrapper (matches PyTorch ActNorm2d) ----------

class ActNorm2d:
    def __init__(self, num_features, scale=1.0):
        self.num_features = num_features
        self.scale = float(scale)
        self.bias = jnp.zeros((1, num_features, 1, 1), jnp.float32)
        self.logs = jnp.zeros((1, num_features, 1, 1), jnp.float32)
        self.inited = False
        self.training = True

    def initialize_parameters(self, x):
        # TODO(synk): one-time data-dependent init statistics are computed in
        # plain JAX (O(B*C*H*W) reduction, runs once) rather than a Pallas
        # kernel; the bool(...) check is a host sync and is not jittable.
        if not self.training:
            return
        if bool(jnp.any(self.bias != 0)):
            self.inited = True
            return
        bias = -jnp.mean(x, axis=(0, 2, 3), keepdims=True)
        variation = jnp.mean(jnp.square(x + bias), axis=(0, 2, 3), keepdims=True)
        logs = jnp.log(self.scale / (jnp.sqrt(variation) + 1e-6))
        self.bias = bias.astype(jnp.float32)
        self.logs = logs.astype(jnp.float32)
        self.inited = True

    def __call__(self, x, logdet=None, reverse=False, conditional_features=None):
        if not self.inited:
            self.initialize_parameters(x)
        y = actnorm2d(x, self.bias, self.logs, reverse=reverse)
        if logdet is not None:
            dlogdet = jnp.sum(self.logs) * (x.shape[2] * x.shape[3])
            logdet = logdet + (dlogdet if not reverse else -dlogdet)
            return y, logdet
        return y


# ---------------- pure-JAX reference for verification ------------------------

def _ref_actnorm(x, bias, logs, logdet=None, reverse=False):
    xf = x.astype(jnp.float32)
    if not reverse:
        y = (xf + bias) * jnp.exp(logs)
    else:
        y = xf * jnp.exp(-logs) - bias
    y = y.astype(x.dtype)
    if logdet is not None:
        dlogdet = jnp.sum(logs) * (x.shape[2] * x.shape[3])
        logdet = logdet + (dlogdet if not reverse else -dlogdet)
        return y, logdet
    return y


if __name__ == "__main__":
    key = jax.random.PRNGKey(0)
    B, C, H, W = 2, 4, 16, 16
    k1, k2, k3 = jax.random.split(key, 3)
    x = jax.random.normal(k1, (B, C, H, W), dtype=jnp.float32)

    # ---- trained-parameter path (exercises the Pallas affine kernel) ----
    layer = ActNorm2d(C, scale=1.0)
    layer.bias = jax.random.normal(k2, (1, C, 1, 1), dtype=jnp.float32) * 0.5
    layer.logs = jax.random.normal(k3, (1, C, 1, 1), dtype=jnp.float32) * 0.3
    layer.inited = True

    y, logdet = layer(x, logdet=0.0, reverse=False)
    y = jax.block_until_ready(y)
    y_ref, logdet_ref = _ref_actnorm(x, layer.bias, layer.logs, 0.0, reverse=False)
    assert y.shape == x.shape
    assert jnp.allclose(y, y_ref, atol=1e-5, rtol=1e-5)
    assert jnp.allclose(logdet, logdet_ref, atol=1e-4, rtol=1e-5)

    x_rec, logdet_rev = layer(y, logdet=logdet, reverse=True)
    x_rec = jax.block_until_ready(x_rec)
    assert jnp.allclose(x_rec, x, atol=1e-5, rtol=1e-5)
    assert jnp.allclose(logdet_rev, 0.0, atol=1e-4)

    # ---- odd shape (non-128-multiple lane dim, rows < 8) -----------------
    x_odd = jax.random.normal(k1, (2, 3, 8, 20), dtype=jnp.float32)
    b_odd = jax.random.normal(k2, (1, 3, 1, 1), dtype=jnp.float32) * 0.3
    l_odd = jax.random.normal(k3, (1, 3, 1, 1), dtype=jnp.float32) * 0.2
    y_odd = jax.block_until_ready(actnorm2d(x_odd, b_odd, l_odd, reverse=False))
    assert jnp.allclose(y_odd, _ref_actnorm(x_odd, b_odd, l_odd), atol=1e-5, rtol=1e-5)

    # ---- bf16 input path (native bf16 compute on v6e/v7x, f32 elsewhere) --
    x_bf = x.astype(jnp.bfloat16)
    y_bf = jax.block_until_ready(actnorm2d(x_bf, layer.bias, layer.logs, reverse=False))
    y_bf_ref = _ref_actnorm(x_bf, layer.bias, layer.logs)
    assert jnp.allclose(y_bf.astype(jnp.float32), y_bf_ref.astype(jnp.float32),
                        atol=5e-2, rtol=5e-2)

    # ---- data-dependent init path (pure-JAX init, Pallas normalization) ----
    layer2 = ActNorm2d(C)
    y2 = jax.block_until_ready(layer2(x, logdet=None, reverse=False))
    assert jnp.allclose(jnp.mean(y2, axis=(0, 2, 3)), 0.0, atol=1e-4)
    assert jnp.allclose(jnp.std(y2, axis=(0, 2, 3)), 1.0, atol=1e-2)

    print("KERNEL_OK")
</pallas_src>

<mosaic_0001>
module attributes {stable_mosaic.version = 11 : i64} {
  func.func @_actnorm_kernel(%arg0: i32, %arg1: i32, %arg2: memref<8x256xf32, #tpu.memory_space<vmem>>, %arg3: memref<8x2xf32, #tpu.memory_space<vmem>>, %arg4: memref<8x256xf32, #tpu.memory_space<vmem>>) attributes {dimension_semantics = [#tpu.dimension_semantics<parallel>, #tpu.dimension_semantics<parallel>], iteration_bounds = array<i64: 1, 1>, scalar_prefetch = 0 : i64, scratch_operands = 0 : i64, tpu.core_type = #tpu.core_type<tc>, window_params = [{transform_indices = @transform_0, window_bounds = array<i64: 8, 256>}, {transform_indices = @transform_1, window_bounds = array<i64: 8, 2>}, {transform_indices = @transform_2, window_bounds = array<i64: 8, 256>}]} {
    %c0 = arith.constant 0 : index
    %c0_0 = arith.constant 0 : index
    %0 = vector.load %arg3[%c0, %c0_0] : memref<8x2xf32, #tpu.memory_space<vmem>>, vector<8x2xf32>
    %1 = vector.extract_strided_slice %0 {offsets = [0, 0], sizes = [8, 1], strides = [1, 1]} : vector<8x2xf32> to vector<8x1xf32>
    %2 = vector.extract_strided_slice %0 {offsets = [0, 1], sizes = [8, 1], strides = [1, 1]} : vector<8x2xf32> to vector<8x1xf32>
    %c0_1 = arith.constant 0 : index
    %c0_2 = arith.constant 0 : index
    %3 = vector.load %arg2[%c0_1, %c0_2] : memref<8x256xf32, #tpu.memory_space<vmem>>, vector<8x256xf32>
    %4 = vector.broadcast %1 : vector<8x1xf32> to vector<8x256xf32>
    %5 = arith.addf %3, %4 : vector<8x256xf32>
    %6 = vector.broadcast %2 : vector<8x1xf32> to vector<8x256xf32>
    %7 = arith.mulf %5, %6 : vector<8x256xf32>
    %c0_3 = arith.constant 0 : index
    %c0_4 = arith.constant 0 : index
    %8 = vector.load %arg4[%c0_3, %c0_4] : memref<8x256xf32, #tpu.memory_space<vmem>>, vector<8x256xf32>
    tpu.vector_store %arg4[%c0_3, %c0_4], %7 {strides = array<i32>} : memref<8x256xf32, #tpu.memory_space<vmem>>, vector<8x256xf32>,
    return
  }
  func.func @transform_0(%arg0: i32, %arg1: i32) -> (i32, i32) {
    %c0_i32 = arith.constant 0 : i32
    return %arg0, %arg1 : i32, i32
  }
  func.func @transform_1(%arg0: i32, %arg1: i32) -> (i32, i32) {
    %c0_i32 = arith.constant 0 : i32
    %c0_i32_0 = arith.constant 0 : i32
    return %arg0, %c0_i32 : i32, i32
  }
  func.func @transform_2(%arg0: i32, %arg1: i32) -> (i32, i32) {
    %c0_i32 = arith.constant 0 : i32
    return %arg0, %arg1 : i32, i32
  }
}

</mosaic_0001>

<llo_original>
// kernel: tpu_custom_call.1
$region0: #{tpu_custom_call.1}
  #allocation0 [shape = 'u32[]', space=smem, size = 0x4, offset = 0x4, fixed_abs, tag = 'smem constant byte address 0x4 - core index']
  #allocation1 [shape = 'u32[144,128]{1,0:T(1,128)}', space=vmem, size = 0x12000, scoped, tag = 'internal scratch']
  %s0 = inlined_call_operand.hbm [shape: f32[8,256], index: 0, kind: input, shape index: {}]
  %s1 = inlined_call_operand.vmem [shape: f32[8,2], index: 1, kind: input, shape index: {}]
  %s2 = inlined_call_operand.hbm [shape: f32[8,256], index: 2, kind: output, shape index: {}]
  %s3 = sld [smem:[#allocation0]]
  $region22: #{tpu_custom_call.1} parent=0
    _
  %s5 = ssub.s32 1, %s3
  %s6 = scalar_select 0, %s5, %s3
  $region1: #{tpu_custom_call.1} parent=0
    #allocation2 [shape = 'u8[8192]{0}', space=vmem, size = 0x2000, scoped, tag = 'input window, operand 0, single buffered']
    #allocation3 [shape = 's32[1]{0}', space=sflag, size = 0x4, scoped, tag = 'scoped memory for tpu_custom_call.1']
    #allocation4 [shape = 's32[1]{0}', space=sflag, size = 0x4, scoped, tag = 'scoped memory for tpu_custom_call.1']
    #allocation5 [shape = 'u8[8192]{0}', space=vmem, size = 0x2000, scoped, tag = 'output window, operand 0, single buffered']
    %7 = vsyncpa [#allocation3], 0
    %8 = vsyncpa [#allocation4], 0
    // Predicated region
    $region2: #{tpu_custom_call.1} parent=1 // pred_check
      _
    $region3: #{tpu_custom_call.1} parent=1 // pred_check_branch
      %10 = sbr.rel (0) target = $region5
    $region4: #{tpu_custom_call.1} parent=1 // pred_region
      %s12 = ssub.s32 256, 256
      %13 = vsyncadd [#allocation3], %s12
      %s15 = sshll.u32 [#allocation2], 4
      %s16 = int_to_ptr.vmem [resolvable:$true] %s15
      %18 = dma.hbm_to_vmem [thread:$0]  %s0, 256, %s16, [#allocation3]
    $region5: #{tpu_custom_call.1} parent=1 // pred_fallthru
      _
    // Predicated region
    $region6: #{tpu_custom_call.1} parent=1 // pred_check
      _
    $region7: #{tpu_custom_call.1} parent=1 // pred_check_branch
      %20 = sbr.rel (0) target = $region9
    $region8: #{tpu_custom_call.1} parent=1 // pred_region
      _
    $region9: #{tpu_custom_call.1} parent=1 // pred_fallthru
      _
    // Predicated region
    $region10: #{tpu_custom_call.1} parent=1 // pred_check
      _
    $region11: #{tpu_custom_call.1} parent=1 // pred_check_branch
      %22 = sbr.rel (0) target = $region13
    $region12: #{tpu_custom_call.1} parent=1 // pred_region
      %23 = dma.done [#allocation3], 256
    $region13: #{tpu_custom_call.1} parent=1 // pred_fallthru
      _
    %v24 = vld [vmem:[%s1] sm:$0xff]
    %v25 = vld [vmem:[#allocation2] sm:$0xff]
    %v26 = vld [vmem:[#allocation2 + $0x8] sm:$0xff]
    %28 = vset.pattern.permute.xlu0 0
    %29 = vperm.xlu0 %28, %v24
    %v30 = vpop.permute.xlu0 %29
    %v32 = vadd.f32 %v25, %v30
    %v33 = vadd.f32 %v26, %v30
    %34 = vset.pattern.permute.xlu0 1
    %35 = vperm.xlu0 %34, %v24
    %v36 = vpop.permute.xlu0 %35
    %v38 = vmul.f32 %v32, %v36
    %v39 = vmul.f32 %v33, %v36
    %40 = vst [vmem:[#allocation5] sm:$0xff] %v38
    %41 = vst [vmem:[#allocation5 + $0x8] sm:$0xff] %v39
    // Predicated region
    $region14: #{tpu_custom_call.1} parent=1 // pred_check
      _
    $region15: #{tpu_custom_call.1} parent=1 // pred_check_branch
      %43 = sbr.rel (0) target = $region17
    $region16: #{tpu_custom_call.1} parent=1 // pred_region
      %s45 = ssub.s32 256, 256
      %46 = vsyncadd [#allocation4], %s45
      %s48 = sshll.u32 [#allocation5], 4
      %s49 = int_to_ptr.vmem [resolvable:$true] %s48
      %51 = dma.vmem_to_hbm [thread:$0]  %s49, 256, %s2, [#allocation4]
    $region17: #{tpu_custom_call.1} parent=1 // pred_fallthru
      _
    // Predicated region
    $region18: #{tpu_custom_call.1} parent=1 // pred_check
      _
    $region19: #{tpu_custom_call.1} parent=1 // pred_check_branch
      %53 = sbr.rel (0) target = $region21
    $region20: #{tpu_custom_call.1} parent=1 // pred_region
      %54 = dma.done [#allocation4], 256
    $region21: #{tpu_custom_call.1} parent=1 // pred_fallthru
      _
    %55 = vsyncpa [#allocation3], 1
    %56 = vsyncpa [#allocation4], 1

</llo_original>
